<compile_context>
chip_gen: v6e
topology: v6e:2x2x1
jax: 0.10.0
libtpu: 0.0.40
codegen_flags: <defaults>
</compile_context>

<pallas_src>
import numpy as np
import jax
import jax.numpy as jnp
from jax.experimental import pallas as pl
from jax.experimental.pallas import tpu as pltpu


def _make_kernel(*, KH, KW, Wp, L, G, CI_G, CO_G, stride, act_norm, eps,
                 neg_slope, norm_count):
    Cout = G * CO_G

    def kernel(x_ref, w_ref, b_ref, gamma_ref, beta_ref, mask_ref, o_ref):
        # x_ref:     (1, Cin, Lp)   flattened zero-padded image (+ tail zeros)
        # w_ref:     (Cout, KH*KW*Cin)  block-diagonal im2col weights
        # b_ref:     (Cout, 1)      conv bias
        # gamma_ref: (Cout, 1)      GroupNorm scale
        # beta_ref:  (Cout, 1)      GroupNorm shift
        # mask_ref:  (1, L)         1.0 where column is a valid output, else 0
        # o_ref:     (1, Cout, L)   L = Ho*Wp (valid cols: wo < Wo per row)

        xv = x_ref[0]  # (Cin, Lp) — load once, slice the value per tap

        # ---- im2col: one contiguous slab per (kh, kw) tap -------------------
        slabs = []
        for kh in range(KH):
            for kw in range(KW):
                start = kh * Wp + kw
                if stride == 1:
                    slabs.append(xv[:, start:start + L])
                else:
                    # strided load straight from the ref skips unwanted rows
                    slabs.append(x_ref[0, :, pl.ds(start, L, stride=stride)])
        patch = jnp.concatenate(slabs, axis=0)          # (KH*KW*Cin, L)

        # ---- single block-diagonal matmul for all groups --------------------
        acc = jnp.dot(w_ref[...], patch,
                      preferred_element_type=jnp.float32)  # (Cout, L)
        acc = acc + b_ref[...]                              # + bias (Cout,1)

        if act_norm:
            mask = mask_ref[...]                            # (1, L)
            inv_n = 1.0 / float(norm_count)
            blocks = []
            for g in range(G):
                blk = acc[g * CO_G:(g + 1) * CO_G, :]       # (CO_G, L)
                blk_m = blk * mask                          # zero-out garbage
                s1 = jnp.sum(blk_m)                         # one-pass stats
                s2 = jnp.sum(blk_m * blk_m)
                mean = s1 * inv_n
                var = s2 * inv_n - mean * mean
                inv_std = jax.lax.rsqrt(var + eps)
                gam = gamma_ref[g * CO_G:(g + 1) * CO_G, :]  # (CO_G, 1)
                bet = beta_ref[g * CO_G:(g + 1) * CO_G, :]
                y = (blk - mean) * inv_std * gam + bet
                y = jnp.where(y >= 0, y, neg_slope * y)      # LeakyReLU(0.2)
                blocks.append(y)
            out = jnp.concatenate(blocks, axis=0)            # (Cout, L)
        else:
            out = acc

        o_ref[...] = out[None, :, :].astype(o_ref.dtype)

    return kernel


def group_conv2d(x_nchw, w, b, gamma, beta, *, stride=1, padding=0, groups=1,
                 act_norm=False, eps=1e-5, neg_slope=0.2):
    """x_nchw: (N, Cin, H, W);  w: (Cout, Cin//groups, KH, KW) (PyTorch layout)."""
    N, Cin, H, W = x_nchw.shape
    Cout, CI_G, KH, KW = w.shape
    G = groups
    assert Cin % G == 0 and Cout % G == 0 and CI_G == Cin // G
    CO_G = Cout // G
    Ho = (H + 2 * padding - KH) // stride + 1
    Wo = (W + 2 * padding - KW) // stride + 1
    Hp, Wp = H + 2 * padding, W + 2 * padding
    L = Ho * Wp                               # kernel's lane-dense output width
    K = KH * KW * Cin

    # ---- glue (cheap XLA): pad, flatten spatial dims, build block-diag W ----
    x_p = jnp.pad(x_nchw, ((0, 0), (0, 0), (padding, padding), (padding, padding)))
    x_flat = x_p.reshape(N, Cin, Hp * Wp)
    max_start = (KH - 1) * Wp + (KW - 1)
    pad_extra = max(0, max_start + stride * (L - 1) + 1 - Hp * Wp)
    if pad_extra > 0:
        x_flat = jnp.pad(x_flat, ((0, 0), (0, 0), (0, pad_extra)))
    Lp = Hp * Wp + pad_extra

    # block-diagonal weight, columns ordered (kh, kw, c)
    w_full = jnp.zeros((Cout, Cin, KH, KW), w.dtype)
    for g in range(G):
        w_full = w_full.at[g * CO_G:(g + 1) * CO_G,
                           g * CI_G:(g + 1) * CI_G].set(w[g * CO_G:(g + 1) * CO_G])
    w_bd = jnp.transpose(w_full, (0, 2, 3, 1)).reshape(Cout, K)

    b2 = b.reshape(Cout, 1)
    gamma2 = gamma.reshape(Cout, 1)
    beta2 = beta.reshape(Cout, 1)

    # validity mask for the L = Ho*Wp columns (first Wo of every Wp block)
    mask_np = (np.arange(L) % Wp < Wo).astype(np.float32).reshape(1, L)
    mask = jnp.asarray(mask_np)

    kernel = _make_kernel(KH=KH, KW=KW, Wp=Wp, L=L, G=G, CI_G=CI_G, CO_G=CO_G,
                          stride=stride, act_norm=act_norm, eps=eps,
                          neg_slope=neg_slope, norm_count=CO_G * Ho * Wo)

    out_flat = pl.pallas_call(
        kernel,
        out_shape=jax.ShapeDtypeStruct((N, Cout, L), x_nchw.dtype),
        grid_spec=pltpu.PrefetchScalarGridSpec(
            num_scalar_prefetch=0,
            grid=(N,),
            in_specs=[
                pl.BlockSpec((1, Cin, Lp), lambda n: (n, 0, 0)),
                pl.BlockSpec((Cout, K), lambda n: (0, 0)),
                pl.BlockSpec((Cout, 1), lambda n: (0, 0)),
                pl.BlockSpec((Cout, 1), lambda n: (0, 0)),
                pl.BlockSpec((Cout, 1), lambda n: (0, 0)),
                pl.BlockSpec((1, L), lambda n: (0, 0)),
            ],
            out_specs=pl.BlockSpec((1, Cout, L), lambda n: (n, 0, 0)),
        ),
        compiler_params=pltpu.CompilerParams(dimension_semantics=("parallel",)),
    )(x_flat, w_bd, b2, gamma2, beta2, mask)

    # drop the wrap-around garbage columns: (N, Cout, Ho, Wp) -> [..., :Wo]
    out = out_flat.reshape(N, Cout, Ho, Wp)[:, :, :, :Wo]
    return out


def _reference(x_nchw, w, b, gamma, beta, *, stride, padding, groups,
               act_norm, eps=1e-5, neg_slope=0.2):
    y = jax.lax.conv_general_dilated(
        x_nchw, w, window_strides=(stride, stride),
        padding=[(padding, padding), (padding, padding)],
        dimension_numbers=("NCHW", "OIHW", "NCHW"),
        feature_group_count=groups)
    y = y + b[None, :, None, None]
    if act_norm:
        N, C, H, W = y.shape
        yg = y.reshape(N, groups, C // groups, H, W)
        mean = yg.mean(axis=(2, 3, 4), keepdims=True)
        var = yg.var(axis=(2, 3, 4), keepdims=True)
        yg = (yg - mean) / jnp.sqrt(var + eps)
        y = yg.reshape(N, C, H, W) * gamma[None, :, None, None] + beta[None, :, None, None]
        y = jnp.where(y >= 0, y, neg_slope * y)
    return y


if __name__ == "__main__":
    # Module config: GroupConv2d(8, 8, kernel_size=3, stride=1, padding=1,
    #                            groups=2, act_norm=True)
    N, Cin, H, W = 2, 8, 16, 16
    Cout, Ksz, stride, padding, groups = 8, 3, 1, 1, 2
    act_norm = True

    key = jax.random.PRNGKey(0)
    kx, kw, kb, kg, kbt = jax.random.split(key, 5)
    x = jax.random.normal(kx, (N, Cin, H, W), jnp.float32)
    w = 0.1 * jax.random.normal(kw, (Cout, Cin // groups, Ksz, Ksz), jnp.float32)
    b = 0.1 * jax.random.normal(kb, (Cout,), jnp.float32)
    gamma = 1.0 + 0.1 * jax.random.normal(kg, (Cout,), jnp.float32)
    beta = 0.1 * jax.random.normal(kbt, (Cout,), jnp.float32)

    out = group_conv2d(x, w, b, gamma, beta, stride=stride, padding=padding,
                       groups=groups, act_norm=act_norm)
    out = jax.block_until_ready(out)

    ref = _reference(x, w, b, gamma, beta, stride=stride, padding=padding,
                     groups=groups, act_norm=act_norm)
    np.testing.assert_allclose(np.asarray(out), np.asarray(ref), atol=1e-4, rtol=1e-4)

    print("KERNEL_OK")
</pallas_src>

<mosaic_0001>
module attributes {stable_mosaic.version = 11 : i64} {
  func.func @kernel(%arg0: i32, %arg1: memref<1x8x326xf32, #tpu.memory_space<vmem>>, %arg2: memref<8x72xf32, #tpu.memory_space<vmem>>, %arg3: memref<8x1xf32, #tpu.memory_space<vmem>>, %arg4: memref<8x1xf32, #tpu.memory_space<vmem>>, %arg5: memref<8x1xf32, #tpu.memory_space<vmem>>, %arg6: memref<1x288xf32, #tpu.memory_space<vmem>>, %arg7: memref<1x8x288xf32, #tpu.memory_space<vmem>>) attributes {dimension_semantics = [#tpu.dimension_semantics<parallel>], iteration_bounds = array<i64: 2>, scalar_prefetch = 0 : i64, scratch_operands = 0 : i64, tpu.core_type = #tpu.core_type<tc>, window_params = [{transform_indices = @transform_0, window_bounds = array<i64: 1, 8, 326>}, {pipeline_mode = #tpu.pipeline_mode<synchronous>, transform_indices = @transform_1, window_bounds = array<i64: 8, 72>}, {pipeline_mode = #tpu.pipeline_mode<synchronous>, transform_indices = @transform_2, window_bounds = array<i64: 8, 1>}, {pipeline_mode = #tpu.pipeline_mode<synchronous>, transform_indices = @transform_3, window_bounds = array<i64: 8, 1>}, {pipeline_mode = #tpu.pipeline_mode<synchronous>, transform_indices = @transform_4, window_bounds = array<i64: 8, 1>}, {pipeline_mode = #tpu.pipeline_mode<synchronous>, transform_indices = @transform_5, window_bounds = array<i64: 1, 288>}, {transform_indices = @transform_6, window_bounds = array<i64: 1, 8, 288>}]} {
    %c0 = arith.constant 0 : index
    %c0_0 = arith.constant 0 : index
    %c0_1 = arith.constant 0 : index
    %0 = vector.load %arg1[%c0, %c0_0, %c0_1] : memref<1x8x326xf32, #tpu.memory_space<vmem>>, vector<1x8x326xf32>
    %1 = vector.shape_cast %0 : vector<1x8x326xf32> to vector<8x326xf32>
    %2 = vector.extract_strided_slice %1 {offsets = [0, 0], sizes = [8, 288], strides = [1, 1]} : vector<8x326xf32> to vector<8x288xf32>
    %3 = vector.extract_strided_slice %1 {offsets = [0, 1], sizes = [8, 288], strides = [1, 1]} : vector<8x326xf32> to vector<8x288xf32>
    %4 = vector.extract_strided_slice %1 {offsets = [0, 2], sizes = [8, 288], strides = [1, 1]} : vector<8x326xf32> to vector<8x288xf32>
    %5 = vector.extract_strided_slice %1 {offsets = [0, 18], sizes = [8, 288], strides = [1, 1]} : vector<8x326xf32> to vector<8x288xf32>
    %6 = vector.extract_strided_slice %1 {offsets = [0, 19], sizes = [8, 288], strides = [1, 1]} : vector<8x326xf32> to vector<8x288xf32>
    %7 = vector.extract_strided_slice %1 {offsets = [0, 20], sizes = [8, 288], strides = [1, 1]} : vector<8x326xf32> to vector<8x288xf32>
    %8 = vector.extract_strided_slice %1 {offsets = [0, 36], sizes = [8, 288], strides = [1, 1]} : vector<8x326xf32> to vector<8x288xf32>
    %9 = vector.extract_strided_slice %1 {offsets = [0, 37], sizes = [8, 288], strides = [1, 1]} : vector<8x326xf32> to vector<8x288xf32>
    %10 = vector.extract_strided_slice %1 {offsets = [0, 38], sizes = [8, 288], strides = [1, 1]} : vector<8x326xf32> to vector<8x288xf32>
    %11 = tpu.concatenate %2, %3, %4, %5, %6, %7, %8, %9, %10 in 0 : vector<8x288xf32>, vector<8x288xf32>, vector<8x288xf32>, vector<8x288xf32>, vector<8x288xf32>, vector<8x288xf32>, vector<8x288xf32>, vector<8x288xf32>, vector<8x288xf32> -> vector<72x288xf32>
    %c0_2 = arith.constant 0 : index
    %c0_3 = arith.constant 0 : index
    %12 = vector.load %arg2[%c0_2, %c0_3] : memref<8x72xf32, #tpu.memory_space<vmem>>, vector<8x72xf32>
    %cst = arith.constant dense<0.000000e+00> : vector<8x288xf32>
    %13 = tpu.matmul %12, %11, %cst {dimension_numbers = #tpu.dot_dimension_numbers<[1], [0], [0], [1], [0, 0, 1, 1], [], []>} : vector<8x72xf32>, vector<72x288xf32>, vector<8x288xf32> -> vector<8x288xf32>
    %c0_4 = arith.constant 0 : index
    %c0_5 = arith.constant 0 : index
    %14 = vector.load %arg3[%c0_4, %c0_5] : memref<8x1xf32, #tpu.memory_space<vmem>>, vector<8x1xf32>
    %15 = vector.broadcast %14 : vector<8x1xf32> to vector<8x288xf32>
    %16 = arith.addf %13, %15 : vector<8x288xf32>
    %c0_6 = arith.constant 0 : index
    %c0_7 = arith.constant 0 : index
    %17 = vector.load %arg6[%c0_6, %c0_7] : memref<1x288xf32, #tpu.memory_space<vmem>>, vector<1x288xf32>
    %18 = vector.extract_strided_slice %16 {offsets = [0, 0], sizes = [4, 288], strides = [1, 1]} : vector<8x288xf32> to vector<4x288xf32>
    %19 = vector.broadcast %17 : vector<1x288xf32> to vector<4x288xf32>
    %20 = arith.mulf %18, %19 : vector<4x288xf32>
    %21 = vector.shape_cast %20 : vector<4x288xf32> to vector<1x4x288xf32>
    %cst_8 = arith.constant dense<0.000000e+00> : vector<1xf32>
    %22 = vector.multi_reduction <add>, %21, %cst_8 [1, 2] : vector<1x4x288xf32> to vector<1xf32>
    %23 = vector.shape_cast %22 : vector<1xf32> to vector<1x1x1xf32>
    %24 = vector.extract %23[0, 0, 0] : f32 from vector<1x1x1xf32>
    %25 = arith.mulf %20, %20 : vector<4x288xf32>
    %26 = vector.shape_cast %25 : vector<4x288xf32> to vector<1x4x288xf32>
    %cst_9 = arith.constant dense<0.000000e+00> : vector<1xf32>
    %27 = vector.multi_reduction <add>, %26, %cst_9 [1, 2] : vector<1x4x288xf32> to vector<1xf32>
    %28 = vector.shape_cast %27 : vector<1xf32> to vector<1x1x1xf32>
    %29 = vector.extract %28[0, 0, 0] : f32 from vector<1x1x1xf32>
    %cst_10 = arith.constant 9.765625E-4 : f32
    %30 = arith.mulf %24, %cst_10 : f32
    %cst_11 = arith.constant 9.765625E-4 : f32
    %31 = arith.mulf %29, %cst_11 : f32
    %32 = arith.mulf %30, %30 : f32
    %33 = arith.subf %31, %32 : f32
    %cst_12 = arith.constant 9.99999974E-6 : f32
    %34 = arith.addf %33, %cst_12 : f32
    %35 = math.rsqrt %34 : f32
    %c0_13 = arith.constant 0 : index
    %c0_14 = arith.constant 0 : index
    %36 = vector.load %arg4[%c0_13, %c0_14] : memref<8x1xf32, #tpu.memory_space<vmem>>, vector<4x1xf32>
    %c0_15 = arith.constant 0 : index
    %c0_16 = arith.constant 0 : index
    %37 = vector.load %arg5[%c0_15, %c0_16] : memref<8x1xf32, #tpu.memory_space<vmem>>, vector<4x1xf32>
    %38 = vector.broadcast %30 : f32 to vector<4x288xf32>
    %39 = arith.subf %18, %38 : vector<4x288xf32>
    %40 = vector.broadcast %35 : f32 to vector<4x288xf32>
    %41 = arith.mulf %39, %40 : vector<4x288xf32>
    %42 = vector.broadcast %36 : vector<4x1xf32> to vector<4x288xf32>
    %43 = arith.mulf %41, %42 : vector<4x288xf32>
    %44 = vector.broadcast %37 : vector<4x1xf32> to vector<4x288xf32>
    %45 = arith.addf %43, %44 : vector<4x288xf32>
    %cst_17 = arith.constant 0.000000e+00 : f32
    %46 = vector.broadcast %cst_17 : f32 to vector<4x288xf32>
    %47 = arith.cmpf oge, %45, %46 : vector<4x288xf32>
    %cst_18 = arith.constant 2.000000e-01 : f32
    %48 = vector.broadcast %cst_18 : f32 to vector<4x288xf32>
    %49 = arith.mulf %48, %45 : vector<4x288xf32>
    %50 = arith.select %47, %45, %49 : vector<4x288xi1>, vector<4x288xf32>
    %51 = vector.extract_strided_slice %16 {offsets = [4, 0], sizes = [4, 288], strides = [1, 1]} : vector<8x288xf32> to vector<4x288xf32>
    %52 = vector.broadcast %17 : vector<1x288xf32> to vector<4x288xf32>
    %53 = arith.mulf %51, %52 : vector<4x288xf32>
    %54 = vector.shape_cast %53 : vector<4x288xf32> to vector<1x4x288xf32>
    %cst_19 = arith.constant dense<0.000000e+00> : vector<1xf32>
    %55 = vector.multi_reduction <add>, %54, %cst_19 [1, 2] : vector<1x4x288xf32> to vector<1xf32>
    %56 = vector.shape_cast %55 : vector<1xf32> to vector<1x1x1xf32>
    %57 = vector.extract %56[0, 0, 0] : f32 from vector<1x1x1xf32>
    %58 = arith.mulf %53, %53 : vector<4x288xf32>
    %59 = vector.shape_cast %58 : vector<4x288xf32> to vector<1x4x288xf32>
    %cst_20 = arith.constant dense<0.000000e+00> : vector<1xf32>
    %60 = vector.multi_reduction <add>, %59, %cst_20 [1, 2] : vector<1x4x288xf32> to vector<1xf32>
    %61 = vector.shape_cast %60 : vector<1xf32> to vector<1x1x1xf32>
    %62 = vector.extract %61[0, 0, 0] : f32 from vector<1x1x1xf32>
    %cst_21 = arith.constant 9.765625E-4 : f32
    %63 = arith.mulf %57, %cst_21 : f32
    %cst_22 = arith.constant 9.765625E-4 : f32
    %64 = arith.mulf %62, %cst_22 : f32
    %65 = arith.mulf %63, %63 : f32
    %66 = arith.subf %64, %65 : f32
    %cst_23 = arith.constant 9.99999974E-6 : f32
    %67 = arith.addf %66, %cst_23 : f32
    %68 = math.rsqrt %67 : f32
    %c4 = arith.constant 4 : index
    %c0_24 = arith.constant 0 : index
    %69 = vector.load %arg4[%c4, %c0_24] : memref<8x1xf32, #tpu.memory_space<vmem>>, vector<4x1xf32>
    %c4_25 = arith.constant 4 : index
    %c0_26 = arith.constant 0 : index
    %70 = vector.load %arg5[%c4_25, %c0_26] : memref<8x1xf32, #tpu.memory_space<vmem>>, vector<4x1xf32>
    %71 = vector.broadcast %63 : f32 to vector<4x288xf32>
    %72 = arith.subf %51, %71 : vector<4x288xf32>
    %73 = vector.broadcast %68 : f32 to vector<4x288xf32>
    %74 = arith.mulf %72, %73 : vector<4x288xf32>
    %75 = vector.broadcast %69 : vector<4x1xf32> to vector<4x288xf32>
    %76 = arith.mulf %74, %75 : vector<4x288xf32>
    %77 = vector.broadcast %70 : vector<4x1xf32> to vector<4x288xf32>
    %78 = arith.addf %76, %77 : vector<4x288xf32>
    %cst_27 = arith.constant 0.000000e+00 : f32
    %79 = vector.broadcast %cst_27 : f32 to vector<4x288xf32>
    %80 = arith.cmpf oge, %78, %79 : vector<4x288xf32>
    %cst_28 = arith.constant 2.000000e-01 : f32
    %81 = vector.broadcast %cst_28 : f32 to vector<4x288xf32>
    %82 = arith.mulf %81, %78 : vector<4x288xf32>
    %83 = arith.select %80, %78, %82 : vector<4x288xi1>, vector<4x288xf32>
    %84 = tpu.concatenate %50, %83 in 0 : vector<4x288xf32>, vector<4x288xf32> -> vector<8x288xf32>
    %85 = vector.shape_cast %84 : vector<8x288xf32> to vector<1x8x288xf32>
    %c0_29 = arith.constant 0 : index
    %c0_30 = arith.constant 0 : index
    %c0_31 = arith.constant 0 : index
    %86 = vector.load %arg7[%c0_29, %c0_30, %c0_31] : memref<1x8x288xf32, #tpu.memory_space<vmem>>, vector<1x8x288xf32>
    tpu.vector_store %arg7[%c0_29, %c0_30, %c0_31], %85 {strides = array<i32>} : memref<1x8x288xf32, #tpu.memory_space<vmem>>, vector<1x8x288xf32>,
    return
  }
  func.func @transform_0(%arg0: i32) -> (i32, i32, i32) {
    %c0_i32 = arith.constant 0 : i32
    %c0_i32_0 = arith.constant 0 : i32
    %c0_i32_1 = arith.constant 0 : i32
    return %arg0, %c0_i32, %c0_i32_0 : i32, i32, i32
  }
  func.func @transform_1(%arg0: i32) -> (i32, i32) {
    %c0_i32 = arith.constant 0 : i32
    %c0_i32_0 = arith.constant 0 : i32
    %c0_i32_1 = arith.constant 0 : i32
    return %c0_i32, %c0_i32_0 : i32, i32
  }
  func.func @transform_2(%arg0: i32) -> (i32, i32) {
    %c0_i32 = arith.constant 0 : i32
    %c0_i32_0 = arith.constant 0 : i32
    %c0_i32_1 = arith.constant 0 : i32
    return %c0_i32, %c0_i32_0 : i32, i32
  }
  func.func @transform_3(%arg0: i32) -> (i32, i32) {
    %c0_i32 = arith.constant 0 : i32
    %c0_i32_0 = arith.constant 0 : i32
    %c0_i32_1 = arith.constant 0 : i32
    return %c0_i32, %c0_i32_0 : i32, i32
  }
  func.func @transform_4(%arg0: i32) -> (i32, i32) {
    %c0_i32 = arith.constant 0 : i32
    %c0_i32_0 = arith.constant 0 : i32
    %c0_i32_1 = arith.constant 0 : i32
    return %c0_i32, %c0_i32_0 : i32, i32
  }
  func.func @transform_5(%arg0: i32) -> (i32, i32) {
    %c0_i32 = arith.constant 0 : i32
    %c0_i32_0 = arith.constant 0 : i32
    %c0_i32_1 = arith.constant 0 : i32
    return %c0_i32, %c0_i32_0 : i32, i32
  }
  func.func @transform_6(%arg0: i32) -> (i32, i32, i32) {
    %c0_i32 = arith.constant 0 : i32
    %c0_i32_0 = arith.constant 0 : i32
    %c0_i32_1 = arith.constant 0 : i32
    return %arg0, %c0_i32, %c0_i32_0 : i32, i32, i32
  }
}

</mosaic_0001>

<llo_original>
// kernel: tpu_custom_call.1
$region0: #{tpu_custom_call.1}
  #allocation0 [shape = 'u32[]', space=smem, size = 0x4, offset = 0x4, fixed_abs, tag = 'smem constant byte address 0x4 - core index']
  #allocation1 [shape = 'u32[144,128]{1,0:T(1,128)}', space=vmem, size = 0x12000, scoped, tag = 'internal scratch']
  %s0 = inlined_call_operand.hbm [shape: f32[2,8,326], index: 0, kind: input, shape index: {}]
  %s1 = inlined_call_operand.vmem [shape: f32[8,72], index: 1, kind: input, shape index: {}]
  %s2 = inlined_call_operand.vmem [shape: f32[8,1], index: 2, kind: input, shape index: {}]
  %s3 = inlined_call_operand.vmem [shape: f32[8,1], index: 3, kind: input, shape index: {}]
  %s4 = inlined_call_operand.vmem [shape: f32[8,1], index: 4, kind: input, shape index: {}]
  %s5 = inlined_call_operand.vmem [shape: f32[1,288], index: 5, kind: input, shape index: {}]
  %s6 = inlined_call_operand.hbm [shape: f32[2,8,288], index: 6, kind: output, shape index: {}]
  %s7 = sld [smem:[#allocation0]]
  $region61: #{tpu_custom_call.1} parent=0
    _
  %s9 = ssub.s32 1, %s7
  %s10 = scalar_select 0, %s9, %s7
  $region1: #{tpu_custom_call.1} parent=0
    #allocation2 [shape = 'u8[24576]{0}', space=vmem, size = 0x6000, scoped, tag = 'input window, operand 0']
    #allocation3 [shape = 's32[2]{0}', space=sflag, size = 0x8, scoped, tag = 'scoped memory for tpu_custom_call.1']
    #allocation4 [shape = 's32[2]{0}', space=sflag, size = 0x8, scoped, tag = 'scoped memory for tpu_custom_call.1']
    #allocation5 [shape = 'u8[24576]{0}', space=vmem, size = 0x6000, scoped, tag = 'output window, operand 0']
    %11 = vsyncpa [#allocation3], 0
    %s12 = scalar_lea.sflag [#allocation3], 1
    %13 = vsyncpa %s12, 0
    %14 = vsyncpa [#allocation4], 0
    %s15 = scalar_lea.sflag [#allocation4], 1
    %16 = vsyncpa %s15, 0
    loop: start=0, step=1, limit=4
    $region2: #{tpu_custom_call.1} parent=1 // loop_pre_header
      _
    $region3: #{tpu_custom_call.1} parent=1 // loop_header
      %s18 = sphi 0, %s22
      %p19 = scmp.ge.s32.totalorder %s18, 4
      %s28 = sphi 0, %s30
      %s31 = sphi 0, %s28
      %s32 = sphi 0, %s31
      %s48 = sphi 0, %s32
      %s52 = sphi 0, %s52
      %s54 = sphi 0, %s52
      %s55 = sphi 0, %s54
      %s69 = sphi 0, %s55
      %s73 = sphi 0, %s73
      %s75 = sphi 0, %s73
      %s76 = sphi 0, %s75
      %s90 = sphi 0, %s76
      %s94 = sphi 0, %s94
      %s96 = sphi 0, %s94
      %s97 = sphi 0, %s96
      %s111 = sphi 0, %s97
      %s115 = sphi 0, %s115
      %s117 = sphi 0, %s115
      %s118 = sphi 0, %s117
      %s132 = sphi 0, %s118
      %s136 = sphi 0, %s136
      %s138 = sphi 0, %s136
      %s139 = sphi 0, %s138
      %s153 = sphi 0, %s139
      %s159 = sphi 0, %s161
      %s162 = sphi 0, %s159
      %s163 = sphi 0, %s162
      %s179 = sphi 0, %s163
    $region4: #{tpu_custom_call.1} parent=1 // loop_header_branch
      %21 = sbr.rel (%p19) target = $region8
    $region5: #{tpu_custom_call.1} parent=1 // loop_body
      %s23 = ssub.s32 %s18, 1
      %s24 = ssub.s32 %s18, 2
      %s25 = sadd.s32 %s18, 1
      %s26 = ssub.s32 %s18, %s25
      %p27 = scmp.eq.s32.totalorder %s26, 0
      %s29 = sadd.s32 %s28, 1
      %s30 = scalar_select %p27, %s28, %s29
      %p33 = pneg %p27
      %p34 = scmp.eq.s32.totalorder %s18, 1
      %p35 = por %p33, %p34
      %p36 = scmp.ne.s32.totalorder %s28, %s31
      %p37 = scmp.eq.s32.totalorder %s18, 0
      %p38 = por %p36, %p37
      %p39 = scmp.ne.s32.totalorder %s28, %s31
      %p40 = scmp.eq.s32.totalorder %s23, 1
      %p41 = por %p39, %p40
      %p42 = scmp.ne.s32.totalorder %s31, %s32
      %p43 = scmp.eq.s32.totalorder %s23, 0
      %p44 = por %p42, %p43
      %p45 = scmp.ne.s32.totalorder %s31, %s32
      %p46 = scmp.eq.s32.totalorder %s24, 1
      %p47 = por %p45, %p46
      %p49 = scmp.ne.s32.totalorder %s32, %s48
      %p50 = scmp.eq.s32.totalorder %s24, 0
      %p51 = por %p49, %p50
      %s53 = sadd.s32 %s52, 1
      %p56 = scmp.eq.s32.totalorder %s18, 1
      %p57 = scmp.ne.s32.totalorder %s52, %s54
      %p58 = scmp.eq.s32.totalorder %s18, 0
      %p59 = por %p57, %p58
      %p60 = scmp.ne.s32.totalorder %s52, %s54
      %p61 = scmp.eq.s32.totalorder %s23, 1
      %p62 = por %p60, %p61
      %p63 = scmp.ne.s32.totalorder %s54, %s55
      %p64 = scmp.eq.s32.totalorder %s23, 0
      %p65 = por %p63, %p64
      %p66 = scmp.ne.s32.totalorder %s54, %s55
      %p67 = scmp.eq.s32.totalorder %s24, 1
      %p68 = por %p66, %p67
      %p70 = scmp.ne.s32.totalorder %s55, %s69
      %p71 = scmp.eq.s32.totalorder %s24, 0
      %p72 = por %p70, %p71
      %s74 = sadd.s32 %s73, 1
      %p77 = scmp.eq.s32.totalorder %s18, 1
      %p78 = scmp.ne.s32.totalorder %s73, %s75
      %p79 = scmp.eq.s32.totalorder %s18, 0
      %p80 = por %p78, %p79
      %p81 = scmp.ne.s32.totalorder %s73, %s75
      %p82 = scmp.eq.s32.totalorder %s23, 1
      %p83 = por %p81, %p82
      %p84 = scmp.ne.s32.totalorder %s75, %s76
      %p85 = scmp.eq.s32.totalorder %s23, 0
      %p86 = por %p84, %p85
      %p87 = scmp.ne.s32.totalorder %s75, %s76
      %p88 = scmp.eq.s32.totalorder %s24, 1
      %p89 = por %p87, %p88
      %p91 = scmp.ne.s32.totalorder %s76, %s90
      %p92 = scmp.eq.s32.totalorder %s24, 0
      %p93 = por %p91, %p92
      %s95 = sadd.s32 %s94, 1
      %p98 = scmp.eq.s32.totalorder %s18, 1
      %p99 = scmp.ne.s32.totalorder %s94, %s96
      %p100 = scmp.eq.s32.totalorder %s18, 0
      %p101 = por %p99, %p100
      %p102 = scmp.ne.s32.totalorder %s94, %s96
      %p103 = scmp.eq.s32.totalorder %s23, 1
      %p104 = por %p102, %p103
      %p105 = scmp.ne.s32.totalorder %s96, %s97
      %p106 = scmp.eq.s32.totalorder %s23, 0
      %p107 = por %p105, %p106
      %p108 = scmp.ne.s32.totalorder %s96, %s97
      %p109 = scmp.eq.s32.totalorder %s24, 1
      %p110 = por %p108, %p109
      %p112 = scmp.ne.s32.totalorder %s97, %s111
      %p113 = scmp.eq.s32.totalorder %s24, 0
      %p114 = por %p112, %p113
      %s116 = sadd.s32 %s115, 1
      %p119 = scmp.eq.s32.totalorder %s18, 1
      %p120 = scmp.ne.s32.totalorder %s115, %s117
      %p121 = scmp.eq.s32.totalorder %s18, 0
      %p122 = por %p120, %p121
      %p123 = scmp.ne.s32.totalorder %s115, %s117
      %p124 = scmp.eq.s32.totalorder %s23, 1
      %p125 = por %p123, %p124
      %p126 = scmp.ne.s32.totalorder %s117, %s118
      %p127 = scmp.eq.s32.totalorder %s23, 0
      %p128 = por %p126, %p127
      %p129 = scmp.ne.s32.totalorder %s117, %s118
      %p130 = scmp.eq.s32.totalorder %s24, 1
      %p131 = por %p129, %p130
      %p133 = scmp.ne.s32.totalorder %s118, %s132
      %p134 = scmp.eq.s32.totalorder %s24, 0
      %p135 = por %p133, %p134
      %s137 = sadd.s32 %s136, 1
      %p140 = scmp.eq.s32.totalorder %s18, 1
      %p141 = scmp.ne.s32.totalorder %s136, %s138
      %p142 = scmp.eq.s32.totalorder %s18, 0
      %p143 = por %p141, %p142
      %p144 = scmp.ne.s32.totalorder %s136, %s138
      %p145 = scmp.eq.s32.totalorder %s23, 1
      %p146 = por %p144, %p145
      %p147 = scmp.ne.s32.totalorder %s138, %s139
      %p148 = scmp.eq.s32.totalorder %s23, 0
      %p149 = por %p147, %p148
      %p150 = scmp.ne.s32.totalorder %s138, %s139
      %p151 = scmp.eq.s32.totalorder %s24, 1
      %p152 = por %p150, %p151
      %p154 = scmp.ne.s32.totalorder %s139, %s153
      %p155 = scmp.eq.s32.totalorder %s24, 0
      %p156 = por %p154, %p155
      %s157 = ssub.s32 %s18, %s25
      %p158 = scmp.eq.s32.totalorder %s157, 0
      %s160 = sadd.s32 %s159, 1
      %s161 = scalar_select %p158, %s159, %s160
      %p164 = pneg %p158
      %p165 = scmp.eq.s32.totalorder %s18, 1
      %p166 = por %p164, %p165
      %p167 = scmp.ne.s32.totalorder %s159, %s162
      %p168 = scmp.eq.s32.totalorder %s18, 0
      %p169 = por %p167, %p168
      %p170 = scmp.ne.s32.totalorder %s159, %s162
      %p171 = scmp.eq.s32.totalorder %s23, 1
      %p172 = por %p170, %p171
      %p173 = scmp.ne.s32.totalorder %s162, %s163
      %p174 = scmp.eq.s32.totalorder %s23, 0
      %p175 = por %p173, %p174
      %p176 = scmp.ne.s32.totalorder %s162, %s163
      %p177 = scmp.eq.s32.totalorder %s24, 1
      %p178 = por %p176, %p177
      %p180 = scmp.ne.s32.totalorder %s163, %s179
      %p181 = scmp.eq.s32.totalorder %s24, 0
      %p182 = por %p180, %p181
      %p183 = scmp.le.s32.totalorder 1, %s18
      %p184 = scmp.lt.s32.totalorder %s18, 3
      %p185 = pnand %p183, %p184
      %p186 = pneg %p185
      // Predicated region
      $region9: #{tpu_custom_call.1} parent=5 // pred_check
        _
      $region10: #{tpu_custom_call.1} parent=5 // pred_check_branch
        %188 = sbr.rel (%p185) target = $region12
      $region11: #{tpu_custom_call.1} parent=5 // pred_region
        %s189 = ssub.s32 %s18, 1
        // Predicated region
        $region13: #{tpu_custom_call.1} parent=11 // pred_check
          %p190 = pneg %p65
        $region14: #{tpu_custom_call.1} parent=11 // pred_check_branch
          %192 = sbr.rel (%p190) target = $region16
        $region15: #{tpu_custom_call.1} parent=11 // pred_region
          _
        $region16: #{tpu_custom_call.1} parent=11 // pred_fallthru
          _
        // Predicated region
        $region17: #{tpu_custom_call.1} parent=11 // pred_check
          %p193 = pneg %p86
        $region18: #{tpu_custom_call.1} parent=11 // pred_check_branch
          %195 = sbr.rel (%p193) target = $region20
        $region19: #{tpu_custom_call.1} parent=11 // pred_region
          _
        $region20: #{tpu_custom_call.1} parent=11 // pred_fallthru
          _
        // Predicated region
        $region21: #{tpu_custom_call.1} parent=11 // pred_check
          %p196 = pneg %p107
        $region22: #{tpu_custom_call.1} parent=11 // pred_check_branch
          %198 = sbr.rel (%p196) target = $region24
        $region23: #{tpu_custom_call.1} parent=11 // pred_region
          _
        $region24: #{tpu_custom_call.1} parent=11 // pred_fallthru
          _
        // Predicated region
        $region25: #{tpu_custom_call.1} parent=11 // pred_check
          %p199 = pneg %p128
        $region26: #{tpu_custom_call.1} parent=11 // pred_check_branch
          %201 = sbr.rel (%p199) target = $region28
        $region27: #{tpu_custom_call.1} parent=11 // pred_region
          _
        $region28: #{tpu_custom_call.1} parent=11 // pred_fallthru
          _
        // Predicated region
        $region29: #{tpu_custom_call.1} parent=11 // pred_check
          %p202 = pneg %p149
        $region30: #{tpu_custom_call.1} parent=11 // pred_check_branch
          %204 = sbr.rel (%p202) target = $region32
        $region31: #{tpu_custom_call.1} parent=11 // pred_region
          _
        $region32: #{tpu_custom_call.1} parent=11 // pred_fallthru
          _
      $region12: #{tpu_custom_call.1} parent=5 // pred_fallthru
        _
      %p205 = scmp.lt.s32.totalorder %s18, 2
      // Predicated region
      $region33: #{tpu_custom_call.1} parent=5 // pred_check
        %p206 = pneg %p205
      $region34: #{tpu_custom_call.1} parent=5 // pred_check_branch
        %208 = sbr.rel (%p206) target = $region36
      $region35: #{tpu_custom_call.1} parent=5 // pred_region
        // Predicated region
        $region37: #{tpu_custom_call.1} parent=35 // pred_check
          %p209 = pneg %p38
        $region38: #{tpu_custom_call.1} parent=35 // pred_check_branch
          %211 = sbr.rel (%p209) target = $region40
        $region39: #{tpu_custom_call.1} parent=35 // pred_region
          %s212 = sand.u32 %s28, 1
          %s213 = scalar_lea.sflag [#allocation3], %s212
          %s214 = sand.u32 %s28, 1
          %s215 = smul.addr %s214, 24
          %s216 = scalar_lea.vmem [#allocation2], %s215
          %s218 = ssub.s32 384, 384
          %219 = vsyncadd %s213, %s218
          %s220 = smul.addr %s18, 3
          %s221 = smul.addr %s220, 128
          %s222 = scalar_lea.hbm %s0, %s221
          %s224 = sshll.u32 %s216, 4
          %s225 = int_to_ptr.vmem [resolvable:$true] %s224
          %227 = dma.hbm_to_vmem [thread:$0]  %s222, 384, %s225, %s213
        $region40: #{tpu_custom_call.1} parent=35 // pred_fallthru
          _
      $region36: #{tpu_custom_call.1} parent=5 // pred_fallthru
        _
      %p228 = scmp.le.s32.totalorder 1, %s18
      %p229 = scmp.lt.s32.totalorder %s18, 3
      %p230 = pnand %p228, %p229
      %p231 = pneg %p230
      // Predicated region
      $region41: #{tpu_custom_call.1} parent=5 // pred_check
        _
      $region42: #{tpu_custom_call.1} parent=5 // pred_check_branch
        %233 = sbr.rel (%p230) target = $region44
      $region43: #{tpu_custom_call.1} parent=5 // pred_region
        %s234 = ssub.s32 %s18, 1
        %s235 = sand.u32 %s31, 1
        %s236 = scalar_lea.sflag [#allocation3], %s235
        %s237 = sand.u32 %s31, 1
        %s238 = smul.addr %s237, 24
        %s239 = scalar_lea.vmem [#allocation2], %s238
        // Predicated region
        $region45: #{tpu_custom_call.1} parent=43 // pred_check
          %p240 = pneg %p44
        $region46: #{tpu_custom_call.1} parent=43 // pred_check_branch
          %242 = sbr.rel (%p240) target = $region48
        $region47: #{tpu_custom_call.1} parent=43 // pred_region
          %243 = dma.done %s236, 384
        $region48: #{tpu_custom_call.1} parent=43 // pred_fallthru
          _
        %s244 = sand.u32 %s31, 1
        %s245 = scalar_lea.sflag [#allocation3], %s244
        %s246 = sand.u32 %s31, 1
        %s247 = smul.addr %s246, 24
        %s248 = scalar_lea.vmem [#allocation2], %s247
        %p249 = pneg %p44
        %p250 = pneg %p41
        %p251 = pneg %p65
        %p252 = pneg %p62
        %p253 = pneg %p86
        %p254 = pneg %p83
        %p255 = pneg %p107
        %p256 = pneg %p104
        %p257 = pneg %p128
        %p258 = pneg %p125
        %p259 = pneg %p149
        %p260 = pneg %p146
        %p261 = pneg %p175
        %p262 = pneg %p172
        %s263 = sand.u32 %s162, 1
        %s264 = scalar_lea.sflag [#allocation4], %s263
        %s265 = sand.u32 %s162, 1
        %s266 = smul.addr %s265, 24
        %s267 = scalar_lea.vmem [#allocation5], %s266
        %v268 = vld [vmem:[%s239] sm:$0xff]
        %v269 = vld [vmem:[%s239 + $0x8] sm:$0xff]
        %v270 = vld [vmem:[%s239 + $0x10] sm:$0xff]
        %274 = vrot.lane.b32.xlu0 %v268, 127
        %v275 = vpop.permute.xlu0 %274
        %276 = vrot.lane.b32.xlu0 %v269, 127
        %v277 = vpop.permute.xlu0 %276
        %278 = vrot.lane.b32.xlu0 %v270, 127
        %v279 = vpop.permute.xlu0 %278
        %vm280 = vcmask 1039360
        %v281 = vsel %vm280, %v275, %v277
        %v282 = vsel %vm280, %v277, %v279
        %286 = vrot.lane.b32.xlu0 %v268, 126
        %v287 = vpop.permute.xlu0 %286
        %288 = vrot.lane.b32.xlu0 %v269, 126
        %v289 = vpop.permute.xlu0 %288
        %290 = vrot.lane.b32.xlu0 %v270, 126
        %v291 = vpop.permute.xlu0 %290
        %vm292 = vcmask 1031168
        %v293 = vsel %vm292, %v287, %v289
        %v294 = vsel %vm292, %v289, %v291
        %298 = vrot.lane.b32.xlu0 %v268, 110
        %v299 = vpop.permute.xlu0 %298
        %300 = vrot.lane.b32.xlu0 %v269, 110
        %v301 = vpop.permute.xlu0 %300
        %302 = vrot.lane.b32.xlu0 %v270, 110
        %v303 = vpop.permute.xlu0 %302
        %vm304 = vcmask 900096
        %v305 = vsel %vm304, %v299, %v301
        %v306 = vsel %vm304, %v301, %v303
        %310 = vrot.lane.b32.xlu0 %v268, 109
        %v311 = vpop.permute.xlu0 %310
        %312 = vrot.lane.b32.xlu0 %v269, 109
        %v313 = vpop.permute.xlu0 %312
        %314 = vrot.lane.b32.xlu0 %v270, 109
        %v315 = vpop.permute.xlu0 %314
        %vm316 = vcmask 891904
        %v317 = vsel %vm316, %v311, %v313
        %v318 = vsel %vm316, %v313, %v315
        %322 = vrot.lane.b32.xlu0 %v268, 108
        %v323 = vpop.permute.xlu0 %322
        %324 = vrot.lane.b32.xlu0 %v269, 108
        %v325 = vpop.permute.xlu0 %324
        %326 = vrot.lane.b32.xlu0 %v270, 108
        %v327 = vpop.permute.xlu0 %326
        %vm328 = vcmask 883712
        %v329 = vsel %vm328, %v323, %v325
        %v330 = vsel %vm328, %v325, %v327
        %334 = vrot.lane.b32.xlu0 %v268, 92
        %v335 = vpop.permute.xlu0 %334
        %336 = vrot.lane.b32.xlu0 %v269, 92
        %v337 = vpop.permute.xlu0 %336
        %338 = vrot.lane.b32.xlu0 %v270, 92
        %v339 = vpop.permute.xlu0 %338
        %vm340 = vcmask 752640
        %v341 = vsel %vm340, %v335, %v337
        %v342 = vsel %vm340, %v337, %v339
        %346 = vrot.lane.b32.xlu0 %v268, 91
        %v347 = vpop.permute.xlu0 %346
        %348 = vrot.lane.b32.xlu0 %v269, 91
        %v349 = vpop.permute.xlu0 %348
        %350 = vrot.lane.b32.xlu0 %v270, 91
        %v351 = vpop.permute.xlu0 %350
        %vm352 = vcmask 744448
        %v353 = vsel %vm352, %v347, %v349
        %v354 = vsel %vm352, %v349, %v351
        %358 = vrot.lane.b32.xlu0 %v268, 90
        %v359 = vpop.permute.xlu0 %358
        %360 = vrot.lane.b32.xlu0 %v269, 90
        %v361 = vpop.permute.xlu0 %360
        %362 = vrot.lane.b32.xlu0 %v270, 90
        %v363 = vpop.permute.xlu0 %362
        %vm364 = vcmask 736256
        %v365 = vsel %vm364, %v359, %v361
        %v366 = vsel %vm364, %v361, %v363
        %v370 = vld [vmem:[%s1] sm:$0xff]
        %v371 = vld [vmem:[%s2] sm:$0xff]
        %373 = vset.pattern.permute.xlu0 0
        %374 = vperm.xlu0 %373, %v371
        %v375 = vpop.permute.xlu0 %374
        %vm377 = vcmask 588800
        %v379 = vsel %vm377, %v370, 0
        %381 = vmatprep.subr.mxu0 0.0
        %382 = vmatpush1.msra.mxu0 0.0
        %383 = vmatprep.subr.mxu0 0.0
        %384 = vmatpush1.msra.mxu0 0.0
        %385 = vmatprep.subr.mxu0 0.0
        %386 = vmatpush1.msra.mxu0 0.0
        %387 = vmatprep.subr.mxu0 0.0
        %388 = vmatpush1.msra.mxu0 0.0
        %389 = vmatprep.subr.mxu0 0.0
        %390 = vmatpush1.msra.mxu0 0.0
        %391 = vmatprep.subr.mxu0 0.0
        %392 = vmatpush1.msra.mxu0 0.0
        %393 = vmatprep.subr.mxu0 0.0
        %394 = vmatpush1.msra.mxu0 0.0
        %395 = vmatprep.subr.mxu0 %v366
        %396 = vmatpush1.msra.mxu0 %v365
        %397 = vmatprep.subr.mxu0 %v354
        %398 = vmatpush1.msra.mxu0 %v353
        %399 = vmatprep.subr.mxu0 %v342
        %400 = vmatpush1.msra.mxu0 %v341
        %401 = vmatprep.subr.mxu0 %v330
        %402 = vmatpush1.msra.mxu0 %v329
        %403 = vmatprep.subr.mxu0 %v318
        %404 = vmatpush1.msra.mxu0 %v317
        %405 = vmatprep.subr.mxu0 %v306
        %406 = vmatpush1.msra.mxu0 %v305
        %407 = vmatprep.subr.mxu0 %v294
        %408 = vmatpush1.msra.mxu0 %v293
        %409 = vmatprep.subr.mxu0 %v282
        %410 = vmatpush1.msra.mxu0 %v281
        %411 = vmatprep.subr.mxu0 %v269
        %412 = vmatpush1.msra.mxu0 %v268
        %413 = vmatprep.subr.mxu0 0.0
        %414 = vmatpush2.msra.mxu0 0.0
        %415 = vmatprep.subr.mxu0 0.0
        %416 = vmatpush2.msra.mxu0 0.0
        %417 = vmatprep.subr.mxu0 0.0
        %418 = vmatpush2.msra.mxu0 0.0
        %419 = vmatprep.subr.mxu0 0.0
        %420 = vmatpush2.msra.mxu0 0.0
        %421 = vmatprep.subr.mxu0 0.0
        %422 = vmatpush2.msra.mxu0 0.0
        %423 = vmatprep.subr.mxu0 0.0
        %424 = vmatpush2.msra.mxu0 0.0
        %425 = vmatprep.subr.mxu0 0.0
        %426 = vmatpush2.msra.mxu0 0.0
        %427 = vmatprep.subr.mxu0 0.0
        %428 = vmatpush2.msra.mxu0 0.0
        %429 = vmatprep.subr.mxu0 0.0
        %430 = vmatpush2.msra.mxu0 0.0
        %431 = vmatprep.subr.mxu0 0.0
        %432 = vmatpush2.msra.mxu0 0.0
        %433 = vmatprep.subr.mxu0 0.0
        %434 = vmatpush2.msra.mxu0 0.0
        %435 = vmatprep.subr.mxu0 0.0
        %436 = vmatpush2.msra.mxu0 0.0
        %437 = vmatprep.subr.mxu0 0.0
        %438 = vmatpush2.msra.mxu0 0.0
        %439 = vmatprep.subr.mxu0 0.0
        %440 = vmatpush2.msra.mxu0 0.0
        %441 = vmatprep.subr.mxu0 0.0
        %442 = vmatpush2.msra.mxu0 0.0
        %443 = vmatprep.subr.mxu0 0.0
        %444 = vmatpush2.msra.mxu0 0.0
        %445 = vmatprep.mubr.f32.mxu0 0.0
        %446 = vmatmul.mubr.f32.gmra.mxu0 %v379
        %v447 = vpop.f32.mrf.mxu0
        %v448 = vadd.f32 %v375, %v447
        %v449 = vpop.f32.mrf.mxu0
        %v450 = vadd.f32 %v375, %v449
        %451 = vdwg.mxu0
        %452 = vmatprep.subr.mxu0 0.0
        %453 = vmatpush1.msra.mxu0 0.0
        %454 = vmatprep.subr.mxu0 0.0
        %455 = vmatpush1.msra.mxu0 0.0
        %456 = vmatprep.subr.mxu0 0.0
        %457 = vmatpush1.msra.mxu0 0.0
        %458 = vmatprep.subr.mxu0 0.0
        %459 = vmatpush1.msra.mxu0 0.0
        %460 = vmatprep.subr.mxu0 0.0
        %461 = vmatpush1.msra.mxu0 0.0
        %462 = vmatprep.subr.mxu0 0.0
        %463 = vmatpush1.msra.mxu0 0.0
        %464 = vmatprep.subr.mxu0 0.0
        %465 = vmatpush1.msra.mxu0 0.0
        %466 = vmatprep.subr.mxu0 0.0
        %467 = vmatpush1.msra.mxu0 %v363
        %468 = vmatprep.subr.mxu0 0.0
        %469 = vmatpush1.msra.mxu0 %v351
        %470 = vmatprep.subr.mxu0 0.0
        %471 = vmatpush1.msra.mxu0 %v339
        %472 = vmatprep.subr.mxu0 0.0
        %473 = vmatpush1.msra.mxu0 %v327
        %474 = vmatprep.subr.mxu0 0.0
        %475 = vmatpush1.msra.mxu0 %v315
        %476 = vmatprep.subr.mxu0 0.0
        %477 = vmatpush1.msra.mxu0 %v303
        %478 = vmatprep.subr.mxu0 0.0
        %479 = vmatpush1.msra.mxu0 %v291
        %480 = vmatprep.subr.mxu0 0.0
        %481 = vmatpush1.msra.mxu0 %v279
        %482 = vmatprep.subr.mxu0 0.0
        %483 = vmatpush1.msra.mxu0 %v270
        %484 = vmatprep.subr.mxu0 0.0
        %485 = vmatpush2.msra.mxu0 0.0
        %486 = vmatprep.subr.mxu0 0.0
        %487 = vmatpush2.msra.mxu0 0.0
        %488 = vmatprep.subr.mxu0 0.0
        %489 = vmatpush2.msra.mxu0 0.0
        %490 = vmatprep.subr.mxu0 0.0
        %491 = vmatpush2.msra.mxu0 0.0
        %492 = vmatprep.subr.mxu0 0.0
        %493 = vmatpush2.msra.mxu0 0.0
        %494 = vmatprep.subr.mxu0 0.0
        %495 = vmatpush2.msra.mxu0 0.0
        %496 = vmatprep.subr.mxu0 0.0
        %497 = vmatpush2.msra.mxu0 0.0
        %498 = vmatprep.subr.mxu0 0.0
        %499 = vmatpush2.msra.mxu0 0.0
        %500 = vmatprep.subr.mxu0 0.0
        %501 = vmatpush2.msra.mxu0 0.0
        %502 = vmatprep.subr.mxu0 0.0
        %503 = vmatpush2.msra.mxu0 0.0
        %504 = vmatprep.subr.mxu0 0.0
        %505 = vmatpush2.msra.mxu0 0.0
        %506 = vmatprep.subr.mxu0 0.0
        %507 = vmatpush2.msra.mxu0 0.0
        %508 = vmatprep.subr.mxu0 0.0
        %509 = vmatpush2.msra.mxu0 0.0
        %510 = vmatprep.subr.mxu0 0.0
        %511 = vmatpush2.msra.mxu0 0.0
        %512 = vmatprep.subr.mxu0 0.0
        %513 = vmatpush2.msra.mxu0 0.0
        %514 = vmatprep.subr.mxu0 0.0
        %515 = vmatpush2.msra.mxu0 0.0
        %516 = vmatprep.mubr.f32.mxu0 0.0
        %517 = vmatmul.mubr.f32.gmra.mxu0 %v379
        %v518 = vpop.f32.mrf.mxu0
        %v519 = vadd.f32 %v375, %v518
        %v520 = vpop.f32.mrf.mxu0
        %521 = vdwg.mxu0
        %v522 = vld [vmem:[%s5] sm:$0x7]
        %v524 = vlaneseq
        %v525 = vshrl.u32 %v524, 7
        %v526 = vsub.s32 0, %v525
        %v527 = vrot.slane %v522, %v526
        %v528 = vlaneseq
        %v529 = vshrl.u32 %v528, 7
        %v530 = vsub.s32 1, %v529
        %v531 = vrot.slane %v522, %v530
        %v532 = vlaneseq
        %v533 = vshrl.u32 %v532, 7
        %v534 = vsub.s32 2, %v533
        %v535 = vrot.slane %v522, %v534
        %v539 = vmul.f32 %v448, %v527
        %v540 = vmul.f32 %v450, %v531
        %v541 = vmul.f32 %v519, %v535
        %vm542 = vcmask 1043456
        %v543 = vsel %vm542, %v539, 0.0
        %v544 = vsel %vm542, %v540, 0.0
        %v545 = vadd.f32 %v543, %v544
        %vm546 = vcmask 257024
        %v547 = vsel %vm546, %v541, 0.0
        %v548 = vadd.f32 %v545, %v547
        %549 = vadd.xlane.f32.xlu0 %v548
        %v550 = vpop.xlane.xlu0 %549
        %v551 = vrot.slane %v550, 4
        %v552 = vadd.f32 %v550, %v551
        %v553 = vrot.slane %v552, 2
        %v554 = vadd.f32 %v552, %v553
        %v555 = vrot.slane %v554, 1
        %v556 = vadd.f32 %v554, %v555
        %s557 = vtos %v556
        %v558 = vmul.f32 %v539, %v539
        %v559 = vmul.f32 %v540, %v540
        %v560 = vmul.f32 %v541, %v541
        %v561 = vsel %vm542, %v558, 0.0
        %v562 = vsel %vm542, %v559, 0.0
        %v563 = vadd.f32 %v561, %v562
        %v564 = vsel %vm546, %v560, 0.0
        %v565 = vadd.f32 %v563, %v564
        %566 = vadd.xlane.f32.xlu0 %v565
        %v567 = vpop.xlane.xlu0 %566
        %v568 = vrot.slane %v567, 4
        %v569 = vadd.f32 %v567, %v568
        %v570 = vrot.slane %v569, 2
        %v571 = vadd.f32 %v569, %v570
        %v572 = vrot.slane %v571, 1
        %v573 = vadd.f32 %v571, %v572
        %s574 = vtos %v573
        %s575 = smul.f32 %s557, 0.0009765625
        %s576 = smul.f32 %s574, 0.0009765625
        %s577 = smul.f32 %s575, %s575
        %s578 = ssub.f32 %s576, %s577
        %s579 = sadd.f32 %s578, 1e-05
        %v580 = vstv %s579
        %v581 = vrsqrt.pop %v580
        %s582 = vtos %v581
        %v583 = vld [vmem:[%s3] sm:$0xf]
        %v584 = vld [vmem:[%s4] sm:$0xf]
        %v585 = vstv %s575
        %v586 = vsub.f32 %v448, %v585
        %v587 = vsub.f32 %v450, %v585
        %v588 = vsub.f32 %v519, %v585
        %v589 = vstv %s582
        %v590 = vmul.f32 %v586, %v589
        %v591 = vmul.f32 %v587, %v589
        %v592 = vmul.f32 %v588, %v589
        %594 = vset.pattern.permute.xlu0 0
        %595 = vperm.xlu0 %594, %v583
        %v596 = vpop.permute.xlu0 %595
        %v598 = vmul.f32 %v590, %v596
        %v599 = vmul.f32 %v591, %v596
        %v600 = vmul.f32 %v592, %v596
        %602 = vset.pattern.permute.xlu0 0
        %603 = vperm.xlu0 %602, %v584
        %v604 = vpop.permute.xlu0 %603
        %v606 = vadd.f32 %v598, %v604
        %v607 = vadd.f32 %v599, %v604
        %v608 = vadd.f32 %v600, %v604
        %vm609 = vcmp.ge.f32.partialorder %v606, 0.0
        %vm610 = vcmp.ge.f32.partialorder %v607, 0.0
        %vm611 = vcmp.ge.f32.partialorder %v608, 0.0
        %v612 = vmul.f32 %v606, 0.2
        %v613 = vmul.f32 %v607, 0.2
        %v614 = vmul.f32 %v608, 0.2
        %v615 = vsel %vm609, %v606, %v612
        %v616 = vsel %vm610, %v607, %v613
        %v617 = vsel %vm611, %v608, %v614
        %v621 = vrot.slane %v539, 4
        %v622 = vrot.slane %v540, 4
        %v623 = vrot.slane %v541, 4
        %v627 = vsel %vm542, %v621, 0.0
        %v628 = vsel %vm542, %v622, 0.0
        %v629 = vadd.f32 %v627, %v628
        %v630 = vsel %vm546, %v623, 0.0
        %v631 = vadd.f32 %v629, %v630
        %632 = vadd.xlane.f32.xlu0 %v631
        %v633 = vpop.xlane.xlu0 %632
        %v634 = vrot.slane %v633, 4
        %v635 = vadd.f32 %v633, %v634
        %v636 = vrot.slane %v635, 2
        %v637 = vadd.f32 %v635, %v636
        %v638 = vrot.slane %v637, 1
        %v639 = vadd.f32 %v637, %v638
        %s640 = vtos %v639
        %v644 = vrot.slane %v558, 4
        %v645 = vrot.slane %v559, 4
        %v646 = vrot.slane %v560, 4
        %v650 = vsel %vm542, %v644, 0.0
        %v651 = vsel %vm542, %v645, 0.0
        %v652 = vadd.f32 %v650, %v651
        %v653 = vsel %vm546, %v646, 0.0
        %v654 = vadd.f32 %v652, %v653
        %655 = vadd.xlane.f32.xlu0 %v654
        %v656 = vpop.xlane.xlu0 %655
        %v657 = vrot.slane %v656, 4
        %v658 = vadd.f32 %v656, %v657
        %v659 = vrot.slane %v658, 2
        %v660 = vadd.f32 %v658, %v659
        %v661 = vrot.slane %v660, 1
        %v662 = vadd.f32 %v660, %v661
        %s663 = vtos %v662
        %s664 = smul.f32 %s640, 0.0009765625
        %s665 = smul.f32 %s663, 0.0009765625
        %s666 = smul.f32 %s664, %s664
        %s667 = ssub.f32 %s665, %s666
        %s668 = sadd.f32 %s667, 1e-05
        %v669 = vstv %s668
        %v670 = vrsqrt.pop %v669
        %s671 = vtos %v670
        %v672 = vld [vmem:[%s3 + $0x4] sm:$0xf]
        %v673 = vld [vmem:[%s4 + $0x4] sm:$0xf]
        %v674 = vstv %s664
        %v675 = vsub.f32 %v448, %v674
        %v676 = vsub.f32 %v450, %v674
        %v677 = vsub.f32 %v519, %v674
        %v678 = vstv %s671
        %v679 = vmul.f32 %v675, %v678
        %v680 = vmul.f32 %v676, %v678
        %v681 = vmul.f32 %v677, %v678
        %683 = vset.pattern.permute.xlu0 0
        %684 = vperm.xlu0 %683, %v672
        %v685 = vpop.permute.xlu0 %684
        %v686 = vrot.slane %v685, 4
        %v688 = vmul.f32 %v679, %v686
        %v689 = vmul.f32 %v680, %v686
        %v690 = vmul.f32 %v681, %v686
        %692 = vset.pattern.permute.xlu0 0
        %693 = vperm.xlu0 %692, %v673
        %v694 = vpop.permute.xlu0 %693
        %v695 = vrot.slane %v694, 4
        %v697 = vadd.f32 %v688, %v695
        %v698 = vadd.f32 %v689, %v695
        %v699 = vadd.f32 %v690, %v695
        %vm700 = vcmp.ge.f32.partialorder %v697, 0.0
        %vm701 = vcmp.ge.f32.partialorder %v698, 0.0
        %vm702 = vcmp.ge.f32.partialorder %v699, 0.0
        %v703 = vmul.f32 %v697, 0.2
        %v704 = vmul.f32 %v698, 0.2
        %v705 = vmul.f32 %v699, 0.2
        %v706 = vsel %vm700, %v697, %v703
        %v707 = vsel %vm701, %v698, %v704
        %v708 = vsel %vm702, %v699, %v705
        %v709 = vsel %vm542, %v615, %v706
        %v710 = vsel %vm542, %v616, %v707
        %v711 = vsel %vm542, %v617, %v708
        %712 = vst [vmem:[%s267] sm:$0xff] %v709
        %713 = vst [vmem:[%s267 + $0x8] sm:$0xff] %v710
        %vm714 = vcmask 261120
        %715 = vst.msk [vmem:[%s267 + $0x10] sm:$0xff] %vm714, %v711
        %s716 = sand.u32 %s162, 1
        %s717 = scalar_lea.sflag [#allocation4], %s716
        %s718 = sand.u32 %s162, 1
        %s719 = smul.addr %s718, 24
        %s720 = scalar_lea.vmem [#allocation5], %s719
        // Predicated region
        $region49: #{tpu_custom_call.1} parent=43 // pred_check
          %p721 = pneg %p172
        $region50: #{tpu_custom_call.1} parent=43 // pred_check_branch
          %723 = sbr.rel (%p721) target = $region52
        $region51: #{tpu_custom_call.1} parent=43 // pred_region
          %s725 = ssub.s32 384, 384
          %726 = vsyncadd %s717, %s725
          %s727 = smul.addr %s23, 3
          %s728 = smul.addr %s727, 128
          %s729 = scalar_lea.hbm %s6, %s728
          %s731 = sshll.u32 %s720, 4
          %s732 = int_to_ptr.vmem [resolvable:$true] %s731
          %734 = dma.vmem_to_hbm [thread:$0]  %s732, 384, %s729, %s717
        $region52: #{tpu_custom_call.1} parent=43 // pred_fallthru
          _
      $region44: #{tpu_custom_call.1} parent=5 // pred_fallthru
        _
      %p735 = scmp.le.s32.totalorder 2, %s18
      // Predicated region
      $region53: #{tpu_custom_call.1} parent=5 // pred_check
        %p736 = pneg %p735
      $region54: #{tpu_custom_call.1} parent=5 // pred_check_branch
        %738 = sbr.rel (%p736) target = $region56
      $region55: #{tpu_custom_call.1} parent=5 // pred_region
        %s739 = ssub.s32 %s18, 2
        // Predicated region
        $region57: #{tpu_custom_call.1} parent=55 // pred_check
          %p740 = pneg %p178
        $region58: #{tpu_custom_call.1} parent=55 // pred_check_branch
          %742 = sbr.rel (%p740) target = $region60
        $region59: #{tpu_custom_call.1} parent=55 // pred_region
          %s743 = sand.u32 %s163, 1
          %s744 = scalar_lea.sflag [#allocation4], %s743
          %s745 = sand.u32 %s163, 1
          %s746 = smul.addr %s745, 24
          %s747 = scalar_lea.vmem [#allocation5], %s746
          %748 = dma.done %s744, 384
        $region60: #{tpu_custom_call.1} parent=55 // pred_fallthru
          _
      $region56: #{tpu_custom_call.1} parent=5 // pred_fallthru
        _
    $region6: #{tpu_custom_call.1} parent=1 // loop_footer
      %s22 = sadd.s32 1, %s18
    $region7: #{tpu_custom_call.1} parent=1 // loop_footer_branch
      %17 = sbr.rel target = $region3
    $region8: #{tpu_custom_call.1} parent=1 // loop_exit
      _
    %749 = vsyncpa [#allocation3], 1
    %s750 = scalar_lea.sflag [#allocation3], 1
    %751 = vsyncpa %s750, 1
    %752 = vsyncpa [#allocation4], 1
    %s753 = scalar_lea.sflag [#allocation4], 1
    %754 = vsyncpa %s753, 1

</llo_original>
